<compile_context>
chip_gen: v7x
topology: tpu7x:2x2x1
jax: 0.10.0
libtpu: 0.0.40
codegen_flags: <defaults>
</compile_context>

<pallas_src>
import jax
import jax.numpy as jnp
from jax.experimental import pallas as pl
from jax.experimental.pallas import tpu as pltpu


def _round_up(x, m):
    return ((x + m - 1) // m) * m


def _cdiv(a, b):
    return -(-a // b)


# Conservative per-step budget for the double-buffered x/out tiles (safe under v7x's
# 64 MiB physical / 32 MiB default scoped VMEM; weights are tiny and resident).
_VMEM_TILE_BUDGET_BYTES = 20 * 1024 * 1024
_LANE = 128


def _make_mlp_kernel(output_scale, output_activation):
    """3-layer MLP in feature-major layout: activations are (features, batch_tile)."""

    def kernel(x_ref, w1_ref, b1_ref, w2_ref, b2_ref, w3_ref, b3_ref, o_ref):
        # fc1: (Hp, D) @ (D, tb) -> (Hp, tb), f32 accumulation on the MXU.
        h = jnp.dot(w1_ref[...], x_ref[...], preferred_element_type=jnp.float32)
        h = jnp.maximum(h + b1_ref[...], 0.0)

        # fc2 + ReLU (bias add / ReLU stay f32; cast down only for the MXU feed).
        h = jnp.dot(w2_ref[...], h.astype(w2_ref.dtype),
                    preferred_element_type=jnp.float32)
        h = jnp.maximum(h + b2_ref[...], 0.0)

        # fc3 (output_scale is already folded into w3/b3 when there is no activation).
        h = jnp.dot(w3_ref[...], h.astype(w3_ref.dtype),
                    preferred_element_type=jnp.float32)
        h = h + b3_ref[...]
        if output_activation is not None:
            h = output_activation(h)
            if output_scale != 1.0:        # torch: scale applied AFTER the activation
                h = output_scale * h
        o_ref[...] = h.astype(o_ref.dtype)

    return kernel


def concat_ratio_estimator(inputs, params, *, dim=1, output_scale=1.0,
                           output_activation=None, compute_dtype=jnp.bfloat16,
                           max_batch_tile=8192):
    """Forward: concat(inputs, dim) -> fc1 -> relu -> fc2 -> relu -> fc3 [-> act] -> *scale."""
    w1, b1, w2, b2, w3, b3 = params        # w: [in, out], b: [1, out]

    # Concat once in the wrapper (review item 3); XLA fuses concat+transpose+cast+pad.
    x = jnp.concatenate([jnp.asarray(v, jnp.float32) for v in inputs], axis=dim)
    assert x.ndim == 2, "only 2-D (batch, features) inputs are supported"
    # TODO(synk): higher-rank inputs (torch Linear broadcasting over leading dims) are
    # not handled; flatten leading dims outside if needed.
    batch, D = int(x.shape[0]), int(x.shape[1])
    H, O = int(w1.shape[1]), int(w3.shape[1])
    assert D == int(w1.shape[0]), "concatenated feature width must match fc1 fan-in"

    # Feature-major params: weights become [out, in], biases become columns.
    w1t, b1t = w1.T, b1.T                  # (H, D), (H, 1)
    w2t, b2t = w2.T, b2.T                  # (H, H), (H, 1)
    w3t, b3t = w3.T, b3.T                  # (O, H), (O, 1)

    scale = float(output_scale)
    if output_activation is None and scale != 1.0:
        # No activation => out = scale * (w3 h + b3); fold the scale into the weights.
        w3t = w3t * scale
        b3t = b3t * scale
        scale = 1.0

    # Pad hidden width to a sublane multiple (exact math: zero weights/bias -> zero
    # hidden units, ReLU(0)=0, zero columns of padded w2t/w3t contribute nothing).
    Hp = _round_up(H, 8)
    if Hp != H:
        w1t = jnp.pad(w1t, ((0, Hp - H), (0, 0)))
        b1t = jnp.pad(b1t, ((0, Hp - H), (0, 0)))
        w2t = jnp.pad(w2t, ((0, Hp - H), (0, Hp - H)))
        b2t = jnp.pad(b2t, ((0, Hp - H), (0, 0)))
        w3t = jnp.pad(w3t, ((0, 0), (0, Hp - H)))

    # Pad output rows only to a sublane multiple (8) -- this is all that is ever
    # written back to HBM (no 128-wide pad).  Padded rows may be nonzero when
    # output_activation(0) != 0; they are sliced off below and never exposed.
    Oo = _round_up(O, 8)
    if Oo != O:
        w3t = jnp.pad(w3t, ((0, Oo - O), (0, 0)))
        b3t = jnp.pad(b3t, ((0, Oo - O), (0, 0)))

    # dtype plan: x / weights in compute_dtype (bf16 halves HBM reads, native MXU path),
    # biases + matmul accumulation + output stores stay f32.
    xt = x.T.astype(compute_dtype)                     # (D, batch): batch on lanes
    w1c = w1t.astype(compute_dtype)
    w2c = w2t.astype(compute_dtype)
    w3c = w3t.astype(compute_dtype)
    b1f = b1t.astype(jnp.float32)
    b2f = b2t.astype(jnp.float32)
    b3f = b3t.astype(jnp.float32)

    # --- batch tiling: batch sits on the lane axis -> tiles are multiples of 128 ---
    itemsize = jnp.dtype(compute_dtype).itemsize
    col_bytes = itemsize * D + 4 * Oo                  # x + out bytes per batch column
    tb_cap = max(_LANE, (_VMEM_TILE_BUDGET_BYTES // (2 * col_bytes)) // _LANE * _LANE)
    tb_cap = min(tb_cap, max(_LANE, _round_up(int(max_batch_tile), _LANE)))

    pb0 = _round_up(batch, _LANE)
    steps = _cdiv(pb0, tb_cap)
    if pb0 >= 2 * _LANE:
        steps = max(steps, 2)      # >=2 grid steps so "parallel" can use both v7x TCs
    tb = _round_up(_cdiv(pb0, steps), _LANE)           # near-even split -> minimal pad
    pb = _round_up(pb0, tb)
    if pb != batch:
        xt = jnp.pad(xt, ((0, 0), (0, pb - batch)))

    grid = (pb // tb,)

    def resident(a):
        # Constant index_map: block never changes across grid steps => stays in VMEM.
        zeros = (0,) * a.ndim
        return pl.BlockSpec(tuple(int(s) for s in a.shape), lambda i: zeros)

    out = pl.pallas_call(
        _make_mlp_kernel(scale, output_activation),
        grid=grid,
        in_specs=[pl.BlockSpec((D, tb), lambda i: (0, i)),
                  resident(w1c), resident(b1f),
                  resident(w2c), resident(b2f),
                  resident(w3c), resident(b3f)],
        out_specs=pl.BlockSpec((Oo, tb), lambda i: (0, i)),
        out_shape=jax.ShapeDtypeStruct((Oo, pb), jnp.float32),
        compiler_params=pltpu.CompilerParams(
            dimension_semantics=("parallel",),
            vmem_limit_bytes=32 * 1024 * 1024),
    )(xt, w1c, b1f, w2c, b2f, w3c, b3f)

    # Back to the module's (batch, num_output) layout; padded rows/cols dropped.
    return out[:O, :batch].T


def init_params(key, num_input, num_hidden, num_output=2):
    """Deterministic synthetic init (PyTorch-Linear-like uniform ranges)."""
    ks = jax.random.split(key, 6)

    def lin(kw, kb, fan_in, fan_out):
        bound = 1.0 / jnp.sqrt(jnp.float32(fan_in))
        # stored as [in, out] (pre-transposed relative to torch's [out, in])
        w = jax.random.uniform(kw, (fan_in, fan_out), jnp.float32, -bound, bound)
        b = jax.random.uniform(kb, (1, fan_out), jnp.float32, -bound, bound)
        return w, b

    w1, b1 = lin(ks[0], ks[1], num_input, num_hidden)
    w2, b2 = lin(ks[2], ks[3], num_hidden, num_hidden)
    w3, b3 = lin(ks[4], ks[5], num_hidden, num_output)
    return (w1, b1, w2, b2, w3, b3)


def reference_forward(inputs, params, dim=1, output_scale=1.0, output_activation=None):
    x = jnp.concatenate(inputs, axis=dim).astype(jnp.float32)
    w1, b1, w2, b2, w3, b3 = params
    h = jnp.maximum(x @ w1 + b1, 0.0)
    h = jnp.maximum(h @ w2 + b2, 0.0)
    o = h @ w3 + b3
    if output_activation is not None:
        o = output_activation(o)
    return output_scale * o


# TODO(synk): the train-mode nn.Dropout(p=0.2) branch (dropout=True) is not implemented;
# this kernel is the eval/inference path (dropout=False), matching the module default.

if __name__ == "__main__":
    key = jax.random.PRNGKey(0)
    k_x1, k_x2, k_p, k_xb = jax.random.split(key, 4)

    # Two inputs concatenated along dim=1: [8, 16] + [8, 16] -> num_input = 32
    batch, d1, d2 = 8, 16, 16
    num_input, num_hidden, num_output = d1 + d2, 32, 2

    x1 = jax.random.normal(k_x1, (batch, d1), jnp.float32)
    x2 = jax.random.normal(k_x2, (batch, d2), jnp.float32)
    params = init_params(k_p, num_input, num_hidden, num_output)
    ref = reference_forward((x1, x2), params)

    # 1) f32 path — matches the reference tightly.
    out_f32 = jax.block_until_ready(
        concat_ratio_estimator((x1, x2), params, compute_dtype=jnp.float32))
    assert out_f32.shape == (batch, num_output)
    assert jnp.allclose(out_f32, ref, atol=1e-5, rtol=1e-5)

    # 2) default bf16 reads / f32 accumulation path.
    out_bf16 = jax.block_until_ready(concat_ratio_estimator((x1, x2), params))
    assert out_bf16.shape == (batch, num_output)
    assert jnp.allclose(out_bf16, ref, atol=1e-1, rtol=1e-1)

    # 3) output activation + scale (scale applied AFTER the activation, like torch).
    ref_act = reference_forward((x1, x2), params, output_scale=3.0,
                                output_activation=jax.nn.sigmoid)
    out_act = jax.block_until_ready(
        concat_ratio_estimator((x1, x2), params, output_scale=3.0,
                               output_activation=jax.nn.sigmoid,
                               compute_dtype=jnp.float32))
    assert out_act.shape == (batch, num_output)
    assert jnp.allclose(out_act, ref_act, atol=1e-5, rtol=1e-5)

    # 4) larger, non-aligned batch exercising the multi-step grid + padding path
    #    (also exercises the scale-folded-into-w3 path).
    big = 300
    xb1 = jax.random.normal(k_xb, (big, d1), jnp.float32)
    xb2 = jax.random.normal(jax.random.fold_in(k_xb, 1), (big, d2), jnp.float32)
    ref_big = reference_forward((xb1, xb2), params, output_scale=2.0)
    out_big = jax.block_until_ready(
        concat_ratio_estimator((xb1, xb2), params, output_scale=2.0,
                               compute_dtype=jnp.float32, max_batch_tile=128))
    assert out_big.shape == (big, num_output)
    assert jnp.allclose(out_big, ref_big, atol=1e-5, rtol=1e-5)

    print("KERNEL_OK")
</pallas_src>

<mosaic_0001>
module attributes {stable_mosaic.version = 11 : i64} {
  func.func @kernel(%arg0: i32, %arg1: memref<32x128xf32, #tpu.memory_space<vmem>>, %arg2: memref<32x32xf32, #tpu.memory_space<vmem>>, %arg3: memref<32x1xf32, #tpu.memory_space<vmem>>, %arg4: memref<32x32xf32, #tpu.memory_space<vmem>>, %arg5: memref<32x1xf32, #tpu.memory_space<vmem>>, %arg6: memref<8x32xf32, #tpu.memory_space<vmem>>, %arg7: memref<8x1xf32, #tpu.memory_space<vmem>>, %arg8: memref<8x128xf32, #tpu.memory_space<vmem>>) attributes {dimension_semantics = [#tpu.dimension_semantics<parallel>], iteration_bounds = array<i64: 1>, scalar_prefetch = 0 : i64, scratch_operands = 0 : i64, tpu.core_type = #tpu.core_type<tc>, window_params = [{transform_indices = @transform_0, window_bounds = array<i64: 32, 128>}, {pipeline_mode = #tpu.pipeline_mode<synchronous>, transform_indices = @transform_1, window_bounds = array<i64: 32, 32>}, {pipeline_mode = #tpu.pipeline_mode<synchronous>, transform_indices = @transform_2, window_bounds = array<i64: 32, 1>}, {pipeline_mode = #tpu.pipeline_mode<synchronous>, transform_indices = @transform_3, window_bounds = array<i64: 32, 32>}, {pipeline_mode = #tpu.pipeline_mode<synchronous>, transform_indices = @transform_4, window_bounds = array<i64: 32, 1>}, {pipeline_mode = #tpu.pipeline_mode<synchronous>, transform_indices = @transform_5, window_bounds = array<i64: 8, 32>}, {pipeline_mode = #tpu.pipeline_mode<synchronous>, transform_indices = @transform_6, window_bounds = array<i64: 8, 1>}, {transform_indices = @transform_7, window_bounds = array<i64: 8, 128>}]} {
    %c0 = arith.constant 0 : index
    %c0_0 = arith.constant 0 : index
    %0 = vector.load %arg2[%c0, %c0_0] : memref<32x32xf32, #tpu.memory_space<vmem>>, vector<32x32xf32>
    %c0_1 = arith.constant 0 : index
    %c0_2 = arith.constant 0 : index
    %1 = vector.load %arg1[%c0_1, %c0_2] : memref<32x128xf32, #tpu.memory_space<vmem>>, vector<32x128xf32>
    %cst = arith.constant dense<0.000000e+00> : vector<32x128xf32>
    %2 = tpu.matmul %0, %1, %cst {dimension_numbers = #tpu.dot_dimension_numbers<[1], [0], [0], [1], [0, 0, 1, 1], [], []>} : vector<32x32xf32>, vector<32x128xf32>, vector<32x128xf32> -> vector<32x128xf32>
    %c0_3 = arith.constant 0 : index
    %c0_4 = arith.constant 0 : index
    %3 = vector.load %arg3[%c0_3, %c0_4] : memref<32x1xf32, #tpu.memory_space<vmem>>, vector<32x1xf32>
    %4 = vector.broadcast %3 : vector<32x1xf32> to vector<32x128xf32>
    %5 = arith.addf %2, %4 : vector<32x128xf32>
    %cst_5 = arith.constant 0.000000e+00 : f32
    %6 = vector.broadcast %cst_5 : f32 to vector<32x128xf32>
    %7 = arith.maximumf %5, %6 : vector<32x128xf32>
    %c0_6 = arith.constant 0 : index
    %c0_7 = arith.constant 0 : index
    %8 = vector.load %arg4[%c0_6, %c0_7] : memref<32x32xf32, #tpu.memory_space<vmem>>, vector<32x32xf32>
    %cst_8 = arith.constant dense<0.000000e+00> : vector<32x128xf32>
    %9 = tpu.matmul %8, %7, %cst_8 {dimension_numbers = #tpu.dot_dimension_numbers<[1], [0], [0], [1], [0, 0, 1, 1], [], []>} : vector<32x32xf32>, vector<32x128xf32>, vector<32x128xf32> -> vector<32x128xf32>
    %c0_9 = arith.constant 0 : index
    %c0_10 = arith.constant 0 : index
    %10 = vector.load %arg5[%c0_9, %c0_10] : memref<32x1xf32, #tpu.memory_space<vmem>>, vector<32x1xf32>
    %11 = vector.broadcast %10 : vector<32x1xf32> to vector<32x128xf32>
    %12 = arith.addf %9, %11 : vector<32x128xf32>
    %cst_11 = arith.constant 0.000000e+00 : f32
    %13 = vector.broadcast %cst_11 : f32 to vector<32x128xf32>
    %14 = arith.maximumf %12, %13 : vector<32x128xf32>
    %c0_12 = arith.constant 0 : index
    %c0_13 = arith.constant 0 : index
    %15 = vector.load %arg6[%c0_12, %c0_13] : memref<8x32xf32, #tpu.memory_space<vmem>>, vector<8x32xf32>
    %cst_14 = arith.constant dense<0.000000e+00> : vector<8x128xf32>
    %16 = tpu.matmul %15, %14, %cst_14 {dimension_numbers = #tpu.dot_dimension_numbers<[1], [0], [0], [1], [0, 0, 1, 1], [], []>} : vector<8x32xf32>, vector<32x128xf32>, vector<8x128xf32> -> vector<8x128xf32>
    %c0_15 = arith.constant 0 : index
    %c0_16 = arith.constant 0 : index
    %17 = vector.load %arg7[%c0_15, %c0_16] : memref<8x1xf32, #tpu.memory_space<vmem>>, vector<8x1xf32>
    %18 = vector.broadcast %17 : vector<8x1xf32> to vector<8x128xf32>
    %19 = arith.addf %16, %18 : vector<8x128xf32>
    %c0_17 = arith.constant 0 : index
    %c0_18 = arith.constant 0 : index
    %20 = vector.load %arg8[%c0_17, %c0_18] : memref<8x128xf32, #tpu.memory_space<vmem>>, vector<8x128xf32>
    tpu.vector_store %arg8[%c0_17, %c0_18], %19 {strides = array<i32>} : memref<8x128xf32, #tpu.memory_space<vmem>>, vector<8x128xf32>,
    return
  }
  func.func @transform_0(%arg0: i32) -> (i32, i32) {
    %c0_i32 = arith.constant 0 : i32
    %c0_i32_0 = arith.constant 0 : i32
    return %c0_i32, %arg0 : i32, i32
  }
  func.func @transform_1(%arg0: i32) -> (i32, i32) {
    %c0_i32 = arith.constant 0 : i32
    %c0_i32_0 = arith.constant 0 : i32
    %c0_i32_1 = arith.constant 0 : i32
    return %c0_i32, %c0_i32_0 : i32, i32
  }
  func.func @transform_2(%arg0: i32) -> (i32, i32) {
    %c0_i32 = arith.constant 0 : i32
    %c0_i32_0 = arith.constant 0 : i32
    %c0_i32_1 = arith.constant 0 : i32
    return %c0_i32, %c0_i32_0 : i32, i32
  }
  func.func @transform_3(%arg0: i32) -> (i32, i32) {
    %c0_i32 = arith.constant 0 : i32
    %c0_i32_0 = arith.constant 0 : i32
    %c0_i32_1 = arith.constant 0 : i32
    return %c0_i32, %c0_i32_0 : i32, i32
  }
  func.func @transform_4(%arg0: i32) -> (i32, i32) {
    %c0_i32 = arith.constant 0 : i32
    %c0_i32_0 = arith.constant 0 : i32
    %c0_i32_1 = arith.constant 0 : i32
    return %c0_i32, %c0_i32_0 : i32, i32
  }
  func.func @transform_5(%arg0: i32) -> (i32, i32) {
    %c0_i32 = arith.constant 0 : i32
    %c0_i32_0 = arith.constant 0 : i32
    %c0_i32_1 = arith.constant 0 : i32
    return %c0_i32, %c0_i32_0 : i32, i32
  }
  func.func @transform_6(%arg0: i32) -> (i32, i32) {
    %c0_i32 = arith.constant 0 : i32
    %c0_i32_0 = arith.constant 0 : i32
    %c0_i32_1 = arith.constant 0 : i32
    return %c0_i32, %c0_i32_0 : i32, i32
  }
  func.func @transform_7(%arg0: i32) -> (i32, i32) {
    %c0_i32 = arith.constant 0 : i32
    %c0_i32_0 = arith.constant 0 : i32
    return %c0_i32, %arg0 : i32, i32
  }
}

</mosaic_0001>

<llo_original>
// kernel: tpu_custom_call.1
$region0: #{tpu_custom_call.1}
  #allocation0 [shape = 'u32[]', space=smem, size = 0x4, offset = 0x4, fixed_abs, tag = 'smem constant byte address 0x4 - core index']
  #allocation1 [shape = 'u32[144,128]{1,0:T(1,128)}', space=vmem, size = 0x12000, scoped, tag = 'internal scratch']
  %s0 = inlined_call_operand.vmem [shape: f32[32,128], index: 0, kind: input, shape index: {}]
  %s1 = inlined_call_operand.vmem [shape: f32[32,32], index: 1, kind: input, shape index: {}]
  %s2 = inlined_call_operand.vmem [shape: f32[32,1], index: 2, kind: input, shape index: {}]
  %s3 = inlined_call_operand.hbm [shape: f32[32,32], index: 3, kind: input, shape index: {}]
  %s4 = inlined_call_operand.vmem [shape: f32[32,1], index: 4, kind: input, shape index: {}]
  %s5 = inlined_call_operand.vmem [shape: f32[8,32], index: 5, kind: input, shape index: {}]
  %s6 = inlined_call_operand.vmem [shape: f32[8,1], index: 6, kind: input, shape index: {}]
  %s7 = inlined_call_operand.hbm [shape: f32[8,128], index: 7, kind: output, shape index: {}]
  %s8 = sld [smem:[#allocation0]]
  $region42: #{tpu_custom_call.1} parent=0
    _
  %s10 = ssub.s32 1, %s8
  %s11 = scalar_select 0, %s10, %s8
  $region1: #{tpu_custom_call.1} parent=0
    #allocation2 [shape = 'u8[16384]{0}', space=vmem, size = 0x4000, scoped, tag = 'input window, operand 3, single buffered']
    #allocation3 [shape = 's32[1]{0}', space=sflag, size = 0x4, scoped, tag = 'scoped memory for tpu_custom_call.1']
    #allocation4 [shape = 's32[1]{0}', space=sflag, size = 0x4, scoped, tag = 'scoped memory for tpu_custom_call.1']
    #allocation5 [shape = 'u8[4096]{0}', space=vmem, size = 0x1000, scoped, tag = 'output window, operand 0, single buffered']
    %12 = vsyncpa [#allocation3], 0
    %13 = vsyncpa [#allocation4], 0
    // Predicated region
    $region2: #{tpu_custom_call.1} parent=1 // pred_check
      _
    $region3: #{tpu_custom_call.1} parent=1 // pred_check_branch
      %15 = sbr.rel (0) target = $region5
    $region4: #{tpu_custom_call.1} parent=1 // pred_region
      _
    $region5: #{tpu_custom_call.1} parent=1 // pred_fallthru
      _
    // Predicated region
    $region6: #{tpu_custom_call.1} parent=1 // pred_check
      _
    $region7: #{tpu_custom_call.1} parent=1 // pred_check_branch
      %17 = sbr.rel (0) target = $region9
    $region8: #{tpu_custom_call.1} parent=1 // pred_region
      _
    $region9: #{tpu_custom_call.1} parent=1 // pred_fallthru
      _
    // Predicated region
    $region10: #{tpu_custom_call.1} parent=1 // pred_check
      _
    $region11: #{tpu_custom_call.1} parent=1 // pred_check_branch
      %19 = sbr.rel (0) target = $region13
    $region12: #{tpu_custom_call.1} parent=1 // pred_region
      _
    $region13: #{tpu_custom_call.1} parent=1 // pred_fallthru
      _
    // Predicated region
    $region14: #{tpu_custom_call.1} parent=1 // pred_check
      _
    $region15: #{tpu_custom_call.1} parent=1 // pred_check_branch
      %21 = sbr.rel (0) target = $region17
    $region16: #{tpu_custom_call.1} parent=1 // pred_region
      %s23 = ssub.s32 512, 512
      %24 = vsyncadd [#allocation3], %s23
      %s25 = sshll.u32 [#allocation2], 4
      %s26 = int_to_ptr.vmem [resolvable:$true] %s25
      %31 = dma.hbm_to_vmem [thread:$0]  %s3, 512, %s26, [#allocation3], 128, 128, 8
    $region17: #{tpu_custom_call.1} parent=1 // pred_fallthru
      _
    // Predicated region
    $region18: #{tpu_custom_call.1} parent=1 // pred_check
      _
    $region19: #{tpu_custom_call.1} parent=1 // pred_check_branch
      %33 = sbr.rel (0) target = $region21
    $region20: #{tpu_custom_call.1} parent=1 // pred_region
      _
    $region21: #{tpu_custom_call.1} parent=1 // pred_fallthru
      _
    // Predicated region
    $region22: #{tpu_custom_call.1} parent=1 // pred_check
      _
    $region23: #{tpu_custom_call.1} parent=1 // pred_check_branch
      %35 = sbr.rel (0) target = $region25
    $region24: #{tpu_custom_call.1} parent=1 // pred_region
      _
    $region25: #{tpu_custom_call.1} parent=1 // pred_fallthru
      _
    // Predicated region
    $region26: #{tpu_custom_call.1} parent=1 // pred_check
      _
    $region27: #{tpu_custom_call.1} parent=1 // pred_check_branch
      %37 = sbr.rel (0) target = $region29
    $region28: #{tpu_custom_call.1} parent=1 // pred_region
      _
    $region29: #{tpu_custom_call.1} parent=1 // pred_fallthru
      _
    // Predicated region
    $region30: #{tpu_custom_call.1} parent=1 // pred_check
      _
    $region31: #{tpu_custom_call.1} parent=1 // pred_check_branch
      %39 = sbr.rel (0) target = $region33
    $region32: #{tpu_custom_call.1} parent=1 // pred_region
      %40 = dma.done [#allocation3], 512
    $region33: #{tpu_custom_call.1} parent=1 // pred_fallthru
      _
    %v41 = vld [vmem:[%s1] sm:$0xff]
    %v42 = vld [vmem:[%s1 + $0x8] sm:$0xff]
    %v43 = vld [vmem:[%s1 + $0x10] sm:$0xff]
    %v44 = vld [vmem:[%s1 + $0x18] sm:$0xff]
    %v45 = vld [vmem:[%s0] sm:$0xff]
    %v46 = vld [vmem:[%s0 + $0x8] sm:$0xff]
    %v47 = vld [vmem:[%s0 + $0x10] sm:$0xff]
    %v48 = vld [vmem:[%s0 + $0x18] sm:$0xff]
    %v49 = vld [vmem:[%s2] sm:$0xff]
    %v50 = vld [vmem:[%s2 + $0x8] sm:$0xff]
    %v51 = vld [vmem:[%s2 + $0x10] sm:$0xff]
    %v52 = vld [vmem:[%s2 + $0x18] sm:$0xff]
    %54 = vset.pattern.permute.xlu0 0
    %55 = vperm.xlu0 %54, %v49
    %v56 = vpop.permute.xlu0 %55
    %59 = vset.pattern.permute.xlu0 0
    %60 = vperm.xlu0 %59, %v50
    %v61 = vpop.permute.xlu0 %60
    %64 = vset.pattern.permute.xlu0 0
    %65 = vperm.xlu0 %64, %v51
    %v66 = vpop.permute.xlu0 %65
    %69 = vset.pattern.permute.xlu0 0
    %70 = vperm.xlu0 %69, %v52
    %v71 = vpop.permute.xlu0 %70
    %vm73 = vcmask 261120
    %v75 = vsel %vm73, %v41, 0
    %v78 = vsel %vm73, %v42, 0
    %v81 = vsel %vm73, %v43, 0
    %v84 = vsel %vm73, %v44, 0
    %86 = vmatprep.subr.mxu0 0.0
    %87 = vmatpush1.msra.mxu0 %v45
    %88 = vmatprep.subr.mxu0 0.0
    %89 = vmatpush1.msra.mxu0 %v46
    %90 = vmatprep.subr.mxu0 0.0
    %91 = vmatpush1.msra.mxu0 %v47
    %92 = vmatprep.subr.mxu0 0.0
    %93 = vmatpush1.msra.mxu0 %v48
    %94 = vmatprep.subr.mxu0 0.0
    %95 = vmatpush1.msra.mxu0 0.0
    %96 = vmatprep.subr.mxu0 0.0
    %97 = vmatpush1.msra.mxu0 0.0
    %98 = vmatprep.subr.mxu0 0.0
    %99 = vmatpush1.msra.mxu0 0.0
    %100 = vmatprep.subr.mxu0 0.0
    %101 = vmatpush1.msra.mxu0 0.0
    %102 = vmatprep.subr.mxu0 0.0
    %103 = vmatpush1.msra.mxu0 0.0
    %104 = vmatprep.subr.mxu0 0.0
    %105 = vmatpush1.msra.mxu0 0.0
    %106 = vmatprep.subr.mxu0 0.0
    %107 = vmatpush1.msra.mxu0 0.0
    %108 = vmatprep.subr.mxu0 0.0
    %109 = vmatpush1.msra.mxu0 0.0
    %110 = vmatprep.subr.mxu0 0.0
    %111 = vmatpush1.msra.mxu0 0.0
    %112 = vmatprep.subr.mxu0 0.0
    %113 = vmatpush1.msra.mxu0 0.0
    %114 = vmatprep.subr.mxu0 0.0
    %115 = vmatpush1.msra.mxu0 0.0
    %116 = vmatprep.subr.mxu0 0.0
    %117 = vmatpush1.msra.mxu0 0.0
    %118 = vmatprep.subr.mxu0 0.0
    %119 = vmatpush1.msra.mxu0 0.0
    %120 = vmatprep.subr.mxu0 0.0
    %121 = vmatpush1.msra.mxu0 0.0
    %122 = vmatprep.subr.mxu0 0.0
    %123 = vmatpush1.msra.mxu0 0.0
    %124 = vmatprep.subr.mxu0 0.0
    %125 = vmatpush1.msra.mxu0 0.0
    %126 = vmatprep.subr.mxu0 0.0
    %127 = vmatpush1.msra.mxu0 0.0
    %128 = vmatprep.subr.mxu0 0.0
    %129 = vmatpush1.msra.mxu0 0.0
    %130 = vmatprep.subr.mxu0 0.0
    %131 = vmatpush1.msra.mxu0 0.0
    %132 = vmatprep.subr.mxu0 0.0
    %133 = vmatpush1.msra.mxu0 0.0
    %134 = vmatprep.subr.mxu0 0.0
    %135 = vmatpush1.msra.mxu0 0.0
    %136 = vmatprep.subr.mxu0 0.0
    %137 = vmatpush1.msra.mxu0 0.0
    %138 = vmatprep.subr.mxu0 0.0
    %139 = vmatpush1.msra.mxu0 0.0
    %140 = vmatprep.subr.mxu0 0.0
    %141 = vmatpush1.msra.mxu0 0.0
    %142 = vmatprep.subr.mxu0 0.0
    %143 = vmatpush1.msra.mxu0 0.0
    %144 = vmatprep.subr.mxu0 0.0
    %145 = vmatpush1.msra.mxu0 0.0
    %146 = vmatprep.subr.mxu0 0.0
    %147 = vmatpush1.msra.mxu0 0.0
    %148 = vmatprep.subr.mxu0 0.0
    %149 = vmatpush1.msra.mxu0 0.0
    %150 = vmatprep.mubr.f32.mxu0 0.0
    %151 = vmatmul.mubr.f32.gmra.mrb[0].mxu0 %v75
    %v152 = vpop.f32.mrb[0].mxu0
    %v153 = vadd.f32 %v56, %v152
    %v154 = vpop.f32.mrb[0].mxu0
    %155 = vmatprep.mubr.f32.mxu0 0.0
    %156 = vmatmul.mubr.f32.gmra.mrb[0].mxu0 %v78
    %v157 = vpop.f32.mrb[0].mxu0
    %v158 = vadd.f32 %v61, %v157
    %v159 = vpop.f32.mrb[0].mxu0
    %160 = vmatprep.mubr.f32.mxu0 0.0
    %161 = vmatmul.mubr.f32.gmra.mrb[0].mxu0 %v81
    %v162 = vpop.f32.mrb[0].mxu0
    %v163 = vadd.f32 %v66, %v162
    %v164 = vpop.f32.mrb[0].mxu0
    %165 = vmatprep.mubr.f32.mxu0 0.0
    %166 = vmatmul.mubr.f32.gmra.mrb[0].mxu0 %v84
    %v167 = vpop.f32.mrb[0].mxu0
    %v168 = vadd.f32 %v71, %v167
    %v169 = vpop.f32.mrb[0].mxu0
    %170 = vdwg.mxu0
    %v171 = vmax.f32 %v153, 0.0
    %v172 = vmax.f32 %v158, 0.0
    %v173 = vmax.f32 %v163, 0.0
    %v174 = vmax.f32 %v168, 0.0
    %v175 = vld [vmem:[#allocation2] sm:$0xff]
    %v176 = vld [vmem:[#allocation2 + $0x8] sm:$0xff]
    %v177 = vld [vmem:[#allocation2 + $0x10] sm:$0xff]
    %v178 = vld [vmem:[#allocation2 + $0x18] sm:$0xff]
    %v179 = vld [vmem:[%s4] sm:$0xff]
    %v180 = vld [vmem:[%s4 + $0x8] sm:$0xff]
    %v181 = vld [vmem:[%s4 + $0x10] sm:$0xff]
    %v182 = vld [vmem:[%s4 + $0x18] sm:$0xff]
    %184 = vset.pattern.permute.xlu0 0
    %185 = vperm.xlu0 %184, %v179
    %v186 = vpop.permute.xlu0 %185
    %189 = vset.pattern.permute.xlu0 0
    %190 = vperm.xlu0 %189, %v180
    %v191 = vpop.permute.xlu0 %190
    %194 = vset.pattern.permute.xlu0 0
    %195 = vperm.xlu0 %194, %v181
    %v196 = vpop.permute.xlu0 %195
    %199 = vset.pattern.permute.xlu0 0
    %200 = vperm.xlu0 %199, %v182
    %v201 = vpop.permute.xlu0 %200
    %v204 = vsel %vm73, %v175, 0
    %v207 = vsel %vm73, %v176, 0
    %v210 = vsel %vm73, %v177, 0
    %v213 = vsel %vm73, %v178, 0
    %215 = vmatprep.subr.mxu0 0.0
    %216 = vmatpush1.msra.mxu0 %v171
    %217 = vmatprep.subr.mxu0 0.0
    %218 = vmatpush1.msra.mxu0 %v172
    %219 = vmatprep.subr.mxu0 0.0
    %220 = vmatpush1.msra.mxu0 %v173
    %221 = vmatprep.subr.mxu0 0.0
    %222 = vmatpush1.msra.mxu0 %v174
    %223 = vmatprep.subr.mxu0 0.0
    %224 = vmatpush1.msra.mxu0 0.0
    %225 = vmatprep.subr.mxu0 0.0
    %226 = vmatpush1.msra.mxu0 0.0
    %227 = vmatprep.subr.mxu0 0.0
    %228 = vmatpush1.msra.mxu0 0.0
    %229 = vmatprep.subr.mxu0 0.0
    %230 = vmatpush1.msra.mxu0 0.0
    %231 = vmatprep.subr.mxu0 0.0
    %232 = vmatpush1.msra.mxu0 0.0
    %233 = vmatprep.subr.mxu0 0.0
    %234 = vmatpush1.msra.mxu0 0.0
    %235 = vmatprep.subr.mxu0 0.0
    %236 = vmatpush1.msra.mxu0 0.0
    %237 = vmatprep.subr.mxu0 0.0
    %238 = vmatpush1.msra.mxu0 0.0
    %239 = vmatprep.subr.mxu0 0.0
    %240 = vmatpush1.msra.mxu0 0.0
    %241 = vmatprep.subr.mxu0 0.0
    %242 = vmatpush1.msra.mxu0 0.0
    %243 = vmatprep.subr.mxu0 0.0
    %244 = vmatpush1.msra.mxu0 0.0
    %245 = vmatprep.subr.mxu0 0.0
    %246 = vmatpush1.msra.mxu0 0.0
    %247 = vmatprep.subr.mxu0 0.0
    %248 = vmatpush1.msra.mxu0 0.0
    %249 = vmatprep.subr.mxu0 0.0
    %250 = vmatpush1.msra.mxu0 0.0
    %251 = vmatprep.subr.mxu0 0.0
    %252 = vmatpush1.msra.mxu0 0.0
    %253 = vmatprep.subr.mxu0 0.0
    %254 = vmatpush1.msra.mxu0 0.0
    %255 = vmatprep.subr.mxu0 0.0
    %256 = vmatpush1.msra.mxu0 0.0
    %257 = vmatprep.subr.mxu0 0.0
    %258 = vmatpush1.msra.mxu0 0.0
    %259 = vmatprep.subr.mxu0 0.0
    %260 = vmatpush1.msra.mxu0 0.0
    %261 = vmatprep.subr.mxu0 0.0
    %262 = vmatpush1.msra.mxu0 0.0
    %263 = vmatprep.subr.mxu0 0.0
    %264 = vmatpush1.msra.mxu0 0.0
    %265 = vmatprep.subr.mxu0 0.0
    %266 = vmatpush1.msra.mxu0 0.0
    %267 = vmatprep.subr.mxu0 0.0
    %268 = vmatpush1.msra.mxu0 0.0
    %269 = vmatprep.subr.mxu0 0.0
    %270 = vmatpush1.msra.mxu0 0.0
    %271 = vmatprep.subr.mxu0 0.0
    %272 = vmatpush1.msra.mxu0 0.0
    %273 = vmatprep.subr.mxu0 0.0
    %274 = vmatpush1.msra.mxu0 0.0
    %275 = vmatprep.subr.mxu0 0.0
    %276 = vmatpush1.msra.mxu0 0.0
    %277 = vmatprep.subr.mxu0 0.0
    %278 = vmatpush1.msra.mxu0 0.0
    %279 = vmatprep.mubr.f32.mxu0 0.0
    %280 = vmatmul.mubr.f32.gmra.mrb[0].mxu0 %v204
    %v281 = vpop.f32.mrb[0].mxu0
    %v282 = vadd.f32 %v186, %v281
    %v283 = vpop.f32.mrb[0].mxu0
    %284 = vmatprep.mubr.f32.mxu0 0.0
    %285 = vmatmul.mubr.f32.gmra.mrb[0].mxu0 %v207
    %v286 = vpop.f32.mrb[0].mxu0
    %v287 = vadd.f32 %v191, %v286
    %v288 = vpop.f32.mrb[0].mxu0
    %289 = vmatprep.mubr.f32.mxu0 0.0
    %290 = vmatmul.mubr.f32.gmra.mrb[0].mxu0 %v210
    %v291 = vpop.f32.mrb[0].mxu0
    %v292 = vadd.f32 %v196, %v291
    %v293 = vpop.f32.mrb[0].mxu0
    %294 = vmatprep.mubr.f32.mxu0 0.0
    %295 = vmatmul.mubr.f32.gmra.mrb[0].mxu0 %v213
    %v296 = vpop.f32.mrb[0].mxu0
    %v297 = vadd.f32 %v201, %v296
    %v298 = vpop.f32.mrb[0].mxu0
    %299 = vdwg.mxu0
    %v300 = vmax.f32 %v282, 0.0
    %v301 = vmax.f32 %v287, 0.0
    %v302 = vmax.f32 %v292, 0.0
    %v303 = vmax.f32 %v297, 0.0
    %v304 = vld [vmem:[%s5] sm:$0xff]
    %v305 = vld [vmem:[%s6] sm:$0xff]
    %307 = vset.pattern.permute.xlu0 0
    %308 = vperm.xlu0 %307, %v305
    %v309 = vpop.permute.xlu0 %308
    %v312 = vsel %vm73, %v304, 0
    %314 = vmatprep.subr.mxu0 0.0
    %315 = vmatpush1.msra.mxu0 %v300
    %316 = vmatprep.subr.mxu0 0.0
    %317 = vmatpush1.msra.mxu0 %v301
    %318 = vmatprep.subr.mxu0 0.0
    %319 = vmatpush1.msra.mxu0 %v302
    %320 = vmatprep.subr.mxu0 0.0
    %321 = vmatpush1.msra.mxu0 %v303
    %322 = vmatprep.subr.mxu0 0.0
    %323 = vmatpush1.msra.mxu0 0.0
    %324 = vmatprep.subr.mxu0 0.0
    %325 = vmatpush1.msra.mxu0 0.0
    %326 = vmatprep.subr.mxu0 0.0
    %327 = vmatpush1.msra.mxu0 0.0
    %328 = vmatprep.subr.mxu0 0.0
    %329 = vmatpush1.msra.mxu0 0.0
    %330 = vmatprep.subr.mxu0 0.0
    %331 = vmatpush1.msra.mxu0 0.0
    %332 = vmatprep.subr.mxu0 0.0
    %333 = vmatpush1.msra.mxu0 0.0
    %334 = vmatprep.subr.mxu0 0.0
    %335 = vmatpush1.msra.mxu0 0.0
    %336 = vmatprep.subr.mxu0 0.0
    %337 = vmatpush1.msra.mxu0 0.0
    %338 = vmatprep.subr.mxu0 0.0
    %339 = vmatpush1.msra.mxu0 0.0
    %340 = vmatprep.subr.mxu0 0.0
    %341 = vmatpush1.msra.mxu0 0.0
    %342 = vmatprep.subr.mxu0 0.0
    %343 = vmatpush1.msra.mxu0 0.0
    %344 = vmatprep.subr.mxu0 0.0
    %345 = vmatpush1.msra.mxu0 0.0
    %346 = vmatprep.subr.mxu0 0.0
    %347 = vmatpush1.msra.mxu0 0.0
    %348 = vmatprep.subr.mxu0 0.0
    %349 = vmatpush1.msra.mxu0 0.0
    %350 = vmatprep.subr.mxu0 0.0
    %351 = vmatpush1.msra.mxu0 0.0
    %352 = vmatprep.subr.mxu0 0.0
    %353 = vmatpush1.msra.mxu0 0.0
    %354 = vmatprep.subr.mxu0 0.0
    %355 = vmatpush1.msra.mxu0 0.0
    %356 = vmatprep.subr.mxu0 0.0
    %357 = vmatpush1.msra.mxu0 0.0
    %358 = vmatprep.subr.mxu0 0.0
    %359 = vmatpush1.msra.mxu0 0.0
    %360 = vmatprep.subr.mxu0 0.0
    %361 = vmatpush1.msra.mxu0 0.0
    %362 = vmatprep.subr.mxu0 0.0
    %363 = vmatpush1.msra.mxu0 0.0
    %364 = vmatprep.subr.mxu0 0.0
    %365 = vmatpush1.msra.mxu0 0.0
    %366 = vmatprep.subr.mxu0 0.0
    %367 = vmatpush1.msra.mxu0 0.0
    %368 = vmatprep.subr.mxu0 0.0
    %369 = vmatpush1.msra.mxu0 0.0
    %370 = vmatprep.subr.mxu0 0.0
    %371 = vmatpush1.msra.mxu0 0.0
    %372 = vmatprep.subr.mxu0 0.0
    %373 = vmatpush1.msra.mxu0 0.0
    %374 = vmatprep.subr.mxu0 0.0
    %375 = vmatpush1.msra.mxu0 0.0
    %376 = vmatprep.subr.mxu0 0.0
    %377 = vmatpush1.msra.mxu0 0.0
    %378 = vmatprep.mubr.f32.mxu0 0.0
    %379 = vmatmul.mubr.f32.gmra.mrb[0].mxu0 %v312
    %v380 = vpop.f32.mrb[0].mxu0
    %v381 = vadd.f32 %v309, %v380
    %v382 = vpop.f32.mrb[0].mxu0
    %383 = vdwg.mxu0
    %384 = vst [vmem:[#allocation5] sm:$0xff] %v381
    // Predicated region
    $region34: #{tpu_custom_call.1} parent=1 // pred_check
      _
    $region35: #{tpu_custom_call.1} parent=1 // pred_check_branch
      %386 = sbr.rel (0) target = $region37
    $region36: #{tpu_custom_call.1} parent=1 // pred_region
      %s388 = ssub.s32 128, 128
      %389 = vsyncadd [#allocation4], %s388
      %s391 = sshll.u32 [#allocation5], 4
      %s392 = int_to_ptr.vmem [resolvable:$true] %s391
      %394 = dma.vmem_to_hbm [thread:$0]  %s392, 128, %s7, [#allocation4]
    $region37: #{tpu_custom_call.1} parent=1 // pred_fallthru
      _
    // Predicated region
    $region38: #{tpu_custom_call.1} parent=1 // pred_check
      _
    $region39: #{tpu_custom_call.1} parent=1 // pred_check_branch
      %396 = sbr.rel (0) target = $region41
    $region40: #{tpu_custom_call.1} parent=1 // pred_region
      %397 = dma.done [#allocation4], 128
    $region41: #{tpu_custom_call.1} parent=1 // pred_fallthru
      _
    %398 = vsyncpa [#allocation3], 1
    %399 = vsyncpa [#allocation4], 1

</llo_original>
